<compile_context>
chip_gen: v6e
topology: v6e:2x2x1
jax: 0.10.0
libtpu: 0.0.40
codegen_flags: <defaults>
</compile_context>

<pallas_src>
import numpy as np
import jax
import jax.numpy as jnp
from jax.experimental import pallas as pl
from jax.experimental.pallas import tpu as pltpu

LANES = 128
TP_MAX = 512            # sublane-rows per grid step -> 512 * 128 = 65536 points/step
_SLAB_ROWS = 11         # rows 0-7: corner values, rows 8-10: (fx, fy, fz)


# ---- Pallas kernel: trilinear weights (VPU) + 8-corner weighted reduce ------
# slab_ref : (11, tp, 128)  rows 0-7 = OOB-zeroed corner values, rows 8-10 = fracs
# out_ref  : (tp, 128)      interpolated result (full-vreg, unmasked stores)
def _trilerp_kernel(slab_ref, out_ref):
    fx = slab_ref[8]
    fy = slab_ref[9]
    fz = slab_ref[10]
    gx = 1.0 - fx
    gy = 1.0 - fy
    gz = 1.0 - fz

    wy0z0 = gy * gz
    wy1z0 = fy * gz
    wy0z1 = gy * fz
    wy1z1 = fy * fz

    # corner index c: bit0 -> +x, bit1 -> +y, bit2 -> +z (matches wrapper gather order)
    acc = slab_ref[0] * (gx * wy0z0)
    acc = acc + slab_ref[1] * (fx * wy0z0)
    acc = acc + slab_ref[2] * (gx * wy1z0)
    acc = acc + slab_ref[3] * (fx * wy1z0)
    acc = acc + slab_ref[4] * (gx * wy0z1)
    acc = acc + slab_ref[5] * (fx * wy0z1)
    acc = acc + slab_ref[6] * (gx * wy1z1)
    acc = acc + slab_ref[7] * (fx * wy1z1)
    out_ref[...] = acc


def trilerp_pallas(slab):
    """slab: (11, P, 128) f32 -> (P, 128) f32 interpolated values."""
    _, P, _ = slab.shape
    tp = min(P, TP_MAX)
    n_pts = P * LANES
    cost = pl.CostEstimate(flops=30 * n_pts, transcendentals=0,
                           bytes_accessed=(_SLAB_ROWS + 1) * 4 * n_pts)
    return pl.pallas_call(
        _trilerp_kernel,
        out_shape=jax.ShapeDtypeStruct((P, LANES), jnp.float32),
        grid_spec=pltpu.PrefetchScalarGridSpec(
            num_scalar_prefetch=0,
            grid=(P // tp,),
            in_specs=[pl.BlockSpec((_SLAB_ROWS, tp, LANES), lambda i: (0, i, 0))],
            out_specs=pl.BlockSpec((tp, LANES), lambda i: (i, 0)),
        ),
        compiler_params=pltpu.CompilerParams(dimension_semantics=("parallel",)),
        cost_estimate=cost,
    )(slab)


def _gather_pairs(dflat, starts):
    """One 2-wide contiguous slice per (y,z) corner row -> (N, 2)."""
    return jax.vmap(lambda s: jax.lax.dynamic_slice(dflat, (s,), (2,)))(starts)


# ---- Forward (mirrors DirectImageField.forward) ------------------------------
# data: (S, S, S) == the module's (1, 1, S, S, S) parameter with unit dims squeezed;
# dims are (D, H, W).  grid_sample convention: x[...,0]->W, 1->H, 2->D,
# align_corners=False, padding_mode='zeros'.
def direct_image_field_forward(x, half_extent, data):
    x_shape = x.shape
    pts = x.reshape(-1, 3).astype(jnp.float32) / half_extent     # normalized to [-1, 1]
    n = pts.shape[0]
    S = data.shape[-1]

    # un-normalize (align_corners=False): ix = ((g + 1) * S - 1) / 2
    ix = ((pts[:, 0] + 1.0) * S - 1.0) * 0.5                     # W index
    iy = ((pts[:, 1] + 1.0) * S - 1.0) * 0.5                     # H index
    iz = ((pts[:, 2] + 1.0) * S - 1.0) * 0.5                     # D index
    x0f, y0f, z0f = jnp.floor(ix), jnp.floor(iy), jnp.floor(iz)
    fx, fy, fz = ix - x0f, iy - y0f, iz - z0f
    x0 = x0f.astype(jnp.int32)
    y0 = y0f.astype(jnp.int32)
    z0 = z0f.astype(jnp.int32)

    # XLA gather epilogue, halved via x-contiguity: pad W with one zero column on
    # each side so every (x0, x0+1) pair is one contiguous 2-wide slice; 4 paired
    # gathers instead of 8 scalar gathers.  Zeros-padding mask folded in.
    W = S + 2
    dflat = jnp.pad(data, ((0, 0), (0, 0), (1, 1))).reshape(-1)
    x0c = jnp.clip(x0, -1, S - 1)
    x_ok0 = (x0 >= 0) & (x0 <= S - 1)                            # corner x = x0
    x_ok1 = (x0 >= -1) & (x0 <= S - 2)                           # corner x = x0 + 1

    rows = []
    for dz in (0, 1):
        for dy in (0, 1):
            yi = y0 + dy
            zi = z0 + dz
            row_ok = (yi >= 0) & (yi < S) & (zi >= 0) & (zi < S)
            yic = jnp.clip(yi, 0, S - 1)
            zic = jnp.clip(zi, 0, S - 1)
            start = (zic * S + yic) * W + (x0c + 1)              # +1: leading pad column
            pair = _gather_pairs(dflat, start)                   # (N, 2)
            rows.append(jnp.where(row_ok & x_ok0, pair[:, 0], 0.0))  # dx = 0
            rows.append(jnp.where(row_ok & x_ok1, pair[:, 1], 0.0))  # dx = 1

    # fused single input slab: rows 0-7 corner values, rows 8-10 fracs
    slab = jnp.stack(rows + [fx, fy, fz], axis=0)                # (11, N)

    # pad the point axis so it reshapes to (P, 128) with P a multiple of the tile
    n_pad = -(-n // (8 * LANES)) * (8 * LANES)
    if n_pad > TP_MAX * LANES:
        n_pad = -(-n_pad // (TP_MAX * LANES)) * (TP_MAX * LANES)
    if n_pad != n:
        slab = jnp.pad(slab, ((0, 0), (0, n_pad - n)))
    P = n_pad // LANES
    slab = slab.reshape(_SLAB_ROWS, P, LANES)

    out = trilerp_pallas(slab).reshape(n_pad)                    # (n_pad,)
    return out[:n].reshape(x_shape[:-1])


# ---- Pure-JAX reference (independent corner loop) ----------------------------
def reference_forward(x, half_extent, data):
    x_shape = x.shape
    pts = x.reshape(-1, 3).astype(jnp.float32) / half_extent
    S = data.shape[-1]
    dflat = data.reshape(-1)

    ix = ((pts[:, 0] + 1.0) * S - 1.0) * 0.5
    iy = ((pts[:, 1] + 1.0) * S - 1.0) * 0.5
    iz = ((pts[:, 2] + 1.0) * S - 1.0) * 0.5
    x0 = jnp.floor(ix).astype(jnp.int32)
    y0 = jnp.floor(iy).astype(jnp.int32)
    z0 = jnp.floor(iz).astype(jnp.int32)
    fx, fy, fz = ix - jnp.floor(ix), iy - jnp.floor(iy), iz - jnp.floor(iz)

    out = jnp.zeros(pts.shape[0], jnp.float32)
    for dz in (0, 1):
        for dy in (0, 1):
            for dx in (0, 1):
                xi, yi, zi = x0 + dx, y0 + dy, z0 + dz
                w = ((fx if dx else 1.0 - fx)
                     * (fy if dy else 1.0 - fy)
                     * (fz if dz else 1.0 - fz))
                ok = ((xi >= 0) & (xi < S) & (yi >= 0) & (yi < S)
                      & (zi >= 0) & (zi < S))
                xi = jnp.clip(xi, 0, S - 1)
                yi = jnp.clip(yi, 0, S - 1)
                zi = jnp.clip(zi, 0, S - 1)
                v = dflat[(zi * S + yi) * S + xi]
                out = out + w * jnp.where(ok, v, 0.0)
    return out.reshape(x_shape[:-1])


if __name__ == "__main__":
    key = jax.random.PRNGKey(0)
    k_data, k_x = jax.random.split(key)

    SIZE = 160  # DirectImageFieldConfig.size default
    # module parameter: torch.randn((1, 1, S, S, S)); unit dims squeezed here
    data = jax.random.normal(k_data, (SIZE, SIZE, SIZE), dtype=jnp.float32)

    # module buffer: half_extent = extent.max() / 2
    extent = jnp.array([4.0, 4.0, 4.0], dtype=jnp.float32)
    half_extent = jnp.max(extent) / 2.0

    # (..., 3) query points; some outside the extent to exercise zeros padding
    x = jax.random.uniform(k_x, (2, 32, 32, 3), minval=-2.5, maxval=2.5,
                           dtype=jnp.float32)

    fwd = jax.jit(direct_image_field_forward)
    out = jax.block_until_ready(fwd(x, half_extent, data))
    ref = jax.block_until_ready(jax.jit(reference_forward)(x, half_extent, data))

    assert out.shape == x.shape[:-1], (out.shape, x.shape[:-1])
    err = np.max(np.abs(np.asarray(out) - np.asarray(ref)))
    assert np.allclose(np.asarray(out), np.asarray(ref), rtol=1e-4, atol=1e-5), err
    print("KERNEL_OK")
</pallas_src>

<mosaic_0001>
module attributes {stable_mosaic.version = 11 : i64} {
  func.func @_trilerp_kernel(%arg0: i32, %arg1: memref<11x16x128xf32, #tpu.memory_space<vmem>>, %arg2: memref<16x128xf32, #tpu.memory_space<vmem>>) attributes {dimension_semantics = [#tpu.dimension_semantics<parallel>], iteration_bounds = array<i64: 1>, scalar_prefetch = 0 : i64, scratch_operands = 0 : i64, tpu.core_type = #tpu.core_type<tc>, window_params = [{transform_indices = @transform_0, window_bounds = array<i64: 11, 16, 128>}, {transform_indices = @transform_1, window_bounds = array<i64: 16, 128>}]} {
    %c8 = arith.constant 8 : index
    %c0 = arith.constant 0 : index
    %c0_0 = arith.constant 0 : index
    %0 = vector.load %arg1[%c8, %c0, %c0_0] : memref<11x16x128xf32, #tpu.memory_space<vmem>>, vector<1x16x128xf32>
    %1 = vector.shape_cast %0 : vector<1x16x128xf32> to vector<16x128xf32>
    %c9 = arith.constant 9 : index
    %c0_1 = arith.constant 0 : index
    %c0_2 = arith.constant 0 : index
    %2 = vector.load %arg1[%c9, %c0_1, %c0_2] : memref<11x16x128xf32, #tpu.memory_space<vmem>>, vector<1x16x128xf32>
    %3 = vector.shape_cast %2 : vector<1x16x128xf32> to vector<16x128xf32>
    %c10 = arith.constant 10 : index
    %c0_3 = arith.constant 0 : index
    %c0_4 = arith.constant 0 : index
    %4 = vector.load %arg1[%c10, %c0_3, %c0_4] : memref<11x16x128xf32, #tpu.memory_space<vmem>>, vector<1x16x128xf32>
    %5 = vector.shape_cast %4 : vector<1x16x128xf32> to vector<16x128xf32>
    %cst = arith.constant 1.000000e+00 : f32
    %6 = vector.broadcast %cst : f32 to vector<16x128xf32>
    %7 = arith.subf %6, %1 : vector<16x128xf32>
    %cst_5 = arith.constant 1.000000e+00 : f32
    %8 = vector.broadcast %cst_5 : f32 to vector<16x128xf32>
    %9 = arith.subf %8, %3 : vector<16x128xf32>
    %cst_6 = arith.constant 1.000000e+00 : f32
    %10 = vector.broadcast %cst_6 : f32 to vector<16x128xf32>
    %11 = arith.subf %10, %5 : vector<16x128xf32>
    %12 = arith.mulf %9, %11 : vector<16x128xf32>
    %13 = arith.mulf %3, %11 : vector<16x128xf32>
    %14 = arith.mulf %9, %5 : vector<16x128xf32>
    %15 = arith.mulf %3, %5 : vector<16x128xf32>
    %c0_7 = arith.constant 0 : index
    %c0_8 = arith.constant 0 : index
    %c0_9 = arith.constant 0 : index
    %16 = vector.load %arg1[%c0_7, %c0_8, %c0_9] : memref<11x16x128xf32, #tpu.memory_space<vmem>>, vector<1x16x128xf32>
    %17 = vector.shape_cast %16 : vector<1x16x128xf32> to vector<16x128xf32>
    %18 = arith.mulf %7, %12 : vector<16x128xf32>
    %19 = arith.mulf %17, %18 : vector<16x128xf32>
    %c1 = arith.constant 1 : index
    %c0_10 = arith.constant 0 : index
    %c0_11 = arith.constant 0 : index
    %20 = vector.load %arg1[%c1, %c0_10, %c0_11] : memref<11x16x128xf32, #tpu.memory_space<vmem>>, vector<1x16x128xf32>
    %21 = vector.shape_cast %20 : vector<1x16x128xf32> to vector<16x128xf32>
    %22 = arith.mulf %1, %12 : vector<16x128xf32>
    %23 = arith.mulf %21, %22 : vector<16x128xf32>
    %24 = arith.addf %19, %23 : vector<16x128xf32>
    %c2 = arith.constant 2 : index
    %c0_12 = arith.constant 0 : index
    %c0_13 = arith.constant 0 : index
    %25 = vector.load %arg1[%c2, %c0_12, %c0_13] : memref<11x16x128xf32, #tpu.memory_space<vmem>>, vector<1x16x128xf32>
    %26 = vector.shape_cast %25 : vector<1x16x128xf32> to vector<16x128xf32>
    %27 = arith.mulf %7, %13 : vector<16x128xf32>
    %28 = arith.mulf %26, %27 : vector<16x128xf32>
    %29 = arith.addf %24, %28 : vector<16x128xf32>
    %c3 = arith.constant 3 : index
    %c0_14 = arith.constant 0 : index
    %c0_15 = arith.constant 0 : index
    %30 = vector.load %arg1[%c3, %c0_14, %c0_15] : memref<11x16x128xf32, #tpu.memory_space<vmem>>, vector<1x16x128xf32>
    %31 = vector.shape_cast %30 : vector<1x16x128xf32> to vector<16x128xf32>
    %32 = arith.mulf %1, %13 : vector<16x128xf32>
    %33 = arith.mulf %31, %32 : vector<16x128xf32>
    %34 = arith.addf %29, %33 : vector<16x128xf32>
    %c4 = arith.constant 4 : index
    %c0_16 = arith.constant 0 : index
    %c0_17 = arith.constant 0 : index
    %35 = vector.load %arg1[%c4, %c0_16, %c0_17] : memref<11x16x128xf32, #tpu.memory_space<vmem>>, vector<1x16x128xf32>
    %36 = vector.shape_cast %35 : vector<1x16x128xf32> to vector<16x128xf32>
    %37 = arith.mulf %7, %14 : vector<16x128xf32>
    %38 = arith.mulf %36, %37 : vector<16x128xf32>
    %39 = arith.addf %34, %38 : vector<16x128xf32>
    %c5 = arith.constant 5 : index
    %c0_18 = arith.constant 0 : index
    %c0_19 = arith.constant 0 : index
    %40 = vector.load %arg1[%c5, %c0_18, %c0_19] : memref<11x16x128xf32, #tpu.memory_space<vmem>>, vector<1x16x128xf32>
    %41 = vector.shape_cast %40 : vector<1x16x128xf32> to vector<16x128xf32>
    %42 = arith.mulf %1, %14 : vector<16x128xf32>
    %43 = arith.mulf %41, %42 : vector<16x128xf32>
    %44 = arith.addf %39, %43 : vector<16x128xf32>
    %c6 = arith.constant 6 : index
    %c0_20 = arith.constant 0 : index
    %c0_21 = arith.constant 0 : index
    %45 = vector.load %arg1[%c6, %c0_20, %c0_21] : memref<11x16x128xf32, #tpu.memory_space<vmem>>, vector<1x16x128xf32>
    %46 = vector.shape_cast %45 : vector<1x16x128xf32> to vector<16x128xf32>
    %47 = arith.mulf %7, %15 : vector<16x128xf32>
    %48 = arith.mulf %46, %47 : vector<16x128xf32>
    %49 = arith.addf %44, %48 : vector<16x128xf32>
    %c7 = arith.constant 7 : index
    %c0_22 = arith.constant 0 : index
    %c0_23 = arith.constant 0 : index
    %50 = vector.load %arg1[%c7, %c0_22, %c0_23] : memref<11x16x128xf32, #tpu.memory_space<vmem>>, vector<1x16x128xf32>
    %51 = vector.shape_cast %50 : vector<1x16x128xf32> to vector<16x128xf32>
    %52 = arith.mulf %1, %15 : vector<16x128xf32>
    %53 = arith.mulf %51, %52 : vector<16x128xf32>
    %54 = arith.addf %49, %53 : vector<16x128xf32>
    %c0_24 = arith.constant 0 : index
    %c0_25 = arith.constant 0 : index
    %55 = vector.load %arg2[%c0_24, %c0_25] : memref<16x128xf32, #tpu.memory_space<vmem>>, vector<16x128xf32>
    tpu.vector_store %arg2[%c0_24, %c0_25], %54 {strides = array<i32>} : memref<16x128xf32, #tpu.memory_space<vmem>>, vector<16x128xf32>,
    return
  }
  func.func @transform_0(%arg0: i32) -> (i32, i32, i32) {
    %c0_i32 = arith.constant 0 : i32
    %c0_i32_0 = arith.constant 0 : i32
    %c0_i32_1 = arith.constant 0 : i32
    return %c0_i32, %arg0, %c0_i32_0 : i32, i32, i32
  }
  func.func @transform_1(%arg0: i32) -> (i32, i32) {
    %c0_i32 = arith.constant 0 : i32
    %c0_i32_0 = arith.constant 0 : i32
    return %arg0, %c0_i32 : i32, i32
  }
}

</mosaic_0001>

<llo_original>
// kernel: direct_image_field_forward.1
$region0: #{direct_image_field_forward.1}
  #allocation0 [shape = 'u32[]', space=smem, size = 0x4, offset = 0x4, fixed_abs, tag = 'smem constant byte address 0x4 - core index']
  #allocation1 [shape = 'u32[144,128]{1,0:T(1,128)}', space=vmem, size = 0x12000, scoped, tag = 'internal scratch']
  %s0 = inlined_call_operand.vmem [shape: f32[11,16,128], index: 0, kind: input, shape index: {}]
  %s1 = inlined_call_operand.vmem [shape: f32[16,128], index: 1, kind: output, shape index: {}]
  %s2 = sld [smem:[#allocation0]]
  $region14: #{direct_image_field_forward.1} parent=0
    _
  %s4 = ssub.s32 1, %s2
  %s5 = scalar_select 0, %s4, %s2
  // Predicated region
  $region2: #{direct_image_field_forward.1} parent=0 // pred_check
    _
  $region3: #{direct_image_field_forward.1} parent=0 // pred_check_branch
    %7 = sbr.rel (0) target = $region5
  $region4: #{direct_image_field_forward.1} parent=0 // pred_region
    _
  $region5: #{direct_image_field_forward.1} parent=0 // pred_fallthru
    _
  %s8 = scalar_lea.vmem %s0, 128
  %v9 = vld [vmem:[%s8] sm:$0xff]
  %v10 = vld [vmem:[%s8 + $0x8] sm:$0xff]
  %s11 = scalar_lea.vmem %s0, 144
  %v12 = vld [vmem:[%s11] sm:$0xff]
  %v13 = vld [vmem:[%s11 + $0x8] sm:$0xff]
  %s14 = scalar_lea.vmem %s0, 160
  %v15 = vld [vmem:[%s14] sm:$0xff]
  %v16 = vld [vmem:[%s14 + $0x8] sm:$0xff]
  %v17 = vsub.f32 1.0, %v9
  %v18 = vsub.f32 1.0, %v10
  %v19 = vsub.f32 1.0, %v12
  %v20 = vsub.f32 1.0, %v13
  %v21 = vsub.f32 1.0, %v15
  %v22 = vsub.f32 1.0, %v16
  %v23 = vmul.f32 %v19, %v21
  %v24 = vmul.f32 %v20, %v22
  %v25 = vmul.f32 %v12, %v21
  %v26 = vmul.f32 %v13, %v22
  %v27 = vmul.f32 %v19, %v15
  %v28 = vmul.f32 %v20, %v16
  %v29 = vmul.f32 %v12, %v15
  %v30 = vmul.f32 %v13, %v16
  %v31 = vld [vmem:[%s0] sm:$0xff]
  %v32 = vld [vmem:[%s0 + $0x8] sm:$0xff]
  %v33 = vmul.f32 %v17, %v23
  %v34 = vmul.f32 %v18, %v24
  %v35 = vmul.f32 %v31, %v33
  %v36 = vmul.f32 %v32, %v34
  %s37 = scalar_lea.vmem %s0, 16
  %v38 = vld [vmem:[%s37] sm:$0xff]
  %v39 = vld [vmem:[%s37 + $0x8] sm:$0xff]
  %v40 = vmul.f32 %v9, %v23
  %v41 = vmul.f32 %v10, %v24
  %v42 = vmul.f32 %v38, %v40
  %v43 = vmul.f32 %v39, %v41
  %v44 = vadd.f32 %v35, %v42
  %v45 = vadd.f32 %v36, %v43
  %s46 = scalar_lea.vmem %s0, 32
  %v47 = vld [vmem:[%s46] sm:$0xff]
  %v48 = vld [vmem:[%s46 + $0x8] sm:$0xff]
  %v49 = vmul.f32 %v17, %v25
  %v50 = vmul.f32 %v18, %v26
  %v51 = vmul.f32 %v47, %v49
  %v52 = vmul.f32 %v48, %v50
  %v53 = vadd.f32 %v44, %v51
  %v54 = vadd.f32 %v45, %v52
  %s55 = scalar_lea.vmem %s0, 48
  %v56 = vld [vmem:[%s55] sm:$0xff]
  %v57 = vld [vmem:[%s55 + $0x8] sm:$0xff]
  %v58 = vmul.f32 %v9, %v25
  %v59 = vmul.f32 %v10, %v26
  %v60 = vmul.f32 %v56, %v58
  %v61 = vmul.f32 %v57, %v59
  %v62 = vadd.f32 %v53, %v60
  %v63 = vadd.f32 %v54, %v61
  %s64 = scalar_lea.vmem %s0, 64
  %v65 = vld [vmem:[%s64] sm:$0xff]
  %v66 = vld [vmem:[%s64 + $0x8] sm:$0xff]
  %v67 = vmul.f32 %v17, %v27
  %v68 = vmul.f32 %v18, %v28
  %v69 = vmul.f32 %v65, %v67
  %v70 = vmul.f32 %v66, %v68
  %v71 = vadd.f32 %v62, %v69
  %v72 = vadd.f32 %v63, %v70
  %s73 = scalar_lea.vmem %s0, 80
  %v74 = vld [vmem:[%s73] sm:$0xff]
  %v75 = vld [vmem:[%s73 + $0x8] sm:$0xff]
  %v76 = vmul.f32 %v9, %v27
  %v77 = vmul.f32 %v10, %v28
  %v78 = vmul.f32 %v74, %v76
  %v79 = vmul.f32 %v75, %v77
  %v80 = vadd.f32 %v71, %v78
  %v81 = vadd.f32 %v72, %v79
  %s82 = scalar_lea.vmem %s0, 96
  %v83 = vld [vmem:[%s82] sm:$0xff]
  %v84 = vld [vmem:[%s82 + $0x8] sm:$0xff]
  %v85 = vmul.f32 %v17, %v29
  %v86 = vmul.f32 %v18, %v30
  %v87 = vmul.f32 %v83, %v85
  %v88 = vmul.f32 %v84, %v86
  %v89 = vadd.f32 %v80, %v87
  %v90 = vadd.f32 %v81, %v88
  %s91 = scalar_lea.vmem %s0, 112
  %v92 = vld [vmem:[%s91] sm:$0xff]
  %v93 = vld [vmem:[%s91 + $0x8] sm:$0xff]
  %v94 = vmul.f32 %v9, %v29
  %v95 = vmul.f32 %v10, %v30
  %v96 = vmul.f32 %v92, %v94
  %v97 = vmul.f32 %v93, %v95
  %v98 = vadd.f32 %v89, %v96
  %v99 = vadd.f32 %v90, %v97
  %100 = vst [vmem:[%s1] sm:$0xff] %v98
  %101 = vst [vmem:[%s1 + $0x8] sm:$0xff] %v99
  // Predicated region
  $region6: #{direct_image_field_forward.1} parent=0 // pred_check
    _
  $region7: #{direct_image_field_forward.1} parent=0 // pred_check_branch
    %103 = sbr.rel (0) target = $region9
  $region8: #{direct_image_field_forward.1} parent=0 // pred_region
    _
  $region9: #{direct_image_field_forward.1} parent=0 // pred_fallthru
    _
  // Predicated region
  $region10: #{direct_image_field_forward.1} parent=0 // pred_check
    _
  $region11: #{direct_image_field_forward.1} parent=0 // pred_check_branch
    %105 = sbr.rel (0) target = $region13
  $region12: #{direct_image_field_forward.1} parent=0 // pred_region
    _
  $region13: #{direct_image_field_forward.1} parent=0 // pred_fallthru
    _

</llo_original>
